<compile_context>
chip_gen: v6e
topology: v6e:2x2x1
jax: 0.10.0
libtpu: 0.0.40
codegen_flags: <defaults>
</compile_context>

<pallas_src>
import functools

import jax
import jax.numpy as jnp
from jax import lax
from jax.experimental import pallas as pl
from jax.experimental.pallas import tpu as pltpu


def _irm_kernel(idx_ref, logits_ref, labels_ref, split_ref, out_ref,
                acc_g_ref, acc_erm_ref, *, n_total):
    """One batch tile: accumulate G[e,c] and the erm partial; finalize on last step."""
    del idx_ref  # only used in the BlockSpec index_maps
    pid = pl.program_id(0)
    last = pl.num_programs(0) - 1

    @pl.when(pid == 0)
    def _():
        acc_g_ref[...] = jnp.zeros_like(acc_g_ref)
        acc_erm_ref[...] = jnp.zeros_like(acc_erm_ref)

    logits = logits_ref[...].astype(jnp.float32)      # (T, C)  in-kernel upcast
    labels = labels_ref[...]                          # (T, 1)  int32
    split = split_ref[...].astype(jnp.float32)        # (T, E)
    tile_n, num_classes = logits.shape

    # Mask rows of a (possibly partial) last tile.
    row = pid * tile_n + lax.broadcasted_iota(jnp.int32, (tile_n, 1), 0)
    valid = row < n_total                             # (T, 1) bool

    # --- per-sample softmax / cross-entropy (numerically stable) ---
    m = jnp.max(logits, axis=-1, keepdims=True)
    ez = jnp.exp(logits - m)
    se = jnp.sum(ez, axis=-1, keepdims=True)
    lse = jnp.log(se) + m                             # (T, 1)
    p = ez * pl.reciprocal(se, approx=False)          # softmax probs (T, C)

    col = lax.broadcasted_iota(jnp.int32, (tile_n, num_classes), 1)
    onehot = (col == labels).astype(jnp.float32)      # (T, C)
    logit_y = jnp.sum(logits * onehot, axis=-1, keepdims=True)
    ce = lse - logit_y                                # per-sample CE, (T, 1)

    # --- analytic d CE(o * scale, y) / d scale_c at scale == 1 ---
    g = (p - onehot) * logits                         # (T, C)

    # Mask padded rows (robust against inf/nan garbage in the padded region).
    ce_m = jnp.where(valid, ce, 0.0)
    g_m = jnp.where(valid, g, 0.0)
    split_m = jnp.where(valid, split, 0.0)

    inv_n = jnp.float32(1.0 / n_total)

    # G[e,c] += (1/N) sum_i split[i,e] * g[i,c]  — single MXU contraction over the batch.
    acc_g_ref[...] += inv_n * lax.dot_general(
        split_m, g_m,
        dimension_numbers=(((0,), (0,)), ((), ())),
        preferred_element_type=jnp.float32)

    # erm += (1/N) sum_i ce_i * sum_e split[i,e]  — VPU; avoids a width-1 matmul.
    acc_erm_ref[...] += inv_n * jnp.sum(ce_m * jnp.sum(split_m, axis=-1, keepdims=True))

    @pl.when(pid == last)
    def _():
        G = acc_g_ref[...]
        penalty = jnp.sum(G * G)
        erm = jnp.sum(acc_erm_ref[...])
        final = erm + jnp.float32(10.0) * penalty
        # Pack the three scalars into one lane-aligned (1, 128) output row.
        lane = lax.broadcasted_iota(jnp.int32, (1, 128), 1)
        out_ref[...] = jnp.where(
            lane == 0, final,
            jnp.where(lane == 1, erm,
                      jnp.where(lane == 2, penalty, jnp.float32(0.0))))


def irm_loss_pallas(outputs, labels, split_all, idx, *, tile_n=512):
    """outputs: (N, C) logits (f32 or bf16); labels: (N,) int; split_all: (S, N, E); idx: int."""
    N, C = outputs.shape
    S, N2, E = split_all.shape
    assert N2 == N, "split_all must have shape (num_splits, N, num_envs)"

    labels2d = labels.astype(jnp.int32).reshape(N, 1)
    idx_arr = jnp.asarray(idx, dtype=jnp.int32).reshape((1,))

    # --- pick a sublane-aligned batch tile that fits comfortably in scoped VMEM ---
    vmem_budget = 32 * 1024 * 1024  # within scoped limits on v5e/v6e/v7x once raised

    def _est(tn):
        c_pad = max(((C + 127) // 128) * 128, 128)
        e_pad = max(((E + 127) // 128) * 128, 128)
        per_buf = (tn * c_pad * outputs.dtype.itemsize      # logits tile
                   + tn * 128 * 4                           # labels tile (lane-padded)
                   + tn * e_pad * split_all.dtype.itemsize)  # split tile
        return 2 * per_buf + 4 * 8 * 128 * 4 + (2 << 20)    # double-buffered + scratch/out + slack

    if tile_n >= N:
        tile_n = N                      # single full-extent block (no divisibility constraint)
    else:
        tile_n = max(8, (tile_n // 8) * 8)
    while tile_n > 8 and _est(tile_n) > vmem_budget:
        tile_n = max(8, ((tile_n // 2) // 8) * 8)

    num_tiles = pl.cdiv(N, tile_n)

    grid_spec = pltpu.PrefetchScalarGridSpec(
        num_scalar_prefetch=1,
        grid=(num_tiles,),
        in_specs=[
            pl.BlockSpec((tile_n, C), lambda i, idx_ref: (i, 0)),
            pl.BlockSpec((tile_n, 1), lambda i, idx_ref: (i, 0)),
            # Index split_all directly with the prefetched idx (no HBM gather copy).
            pl.BlockSpec((None, tile_n, E), lambda i, idx_ref: (idx_ref[0], i, 0)),
        ],
        out_specs=pl.BlockSpec((1, 128), lambda i, idx_ref: (0, 0)),
        scratch_shapes=[
            pltpu.VMEM((E, C), jnp.float32),   # G accumulator (resident across N tiles)
            pltpu.VMEM((1, 1), jnp.float32),   # erm accumulator
        ],
    )

    out = pl.pallas_call(
        functools.partial(_irm_kernel, n_total=N),
        out_shape=jax.ShapeDtypeStruct((1, 128), jnp.float32),
        grid_spec=grid_spec,
        compiler_params=pltpu.CompilerParams(
            dimension_semantics=("arbitrary",),
            vmem_limit_bytes=vmem_budget,
        ),
    )(idx_arr, outputs, labels2d, split_all)

    return out[0, 0], out[0, 1], out[0, 2]


def irm_loss_ref(outputs, labels, split):
    """Pure-JAX reference mirroring the PyTorch module (autodiff on the (1,C) scale)."""
    outputs = outputs.astype(jnp.float32)
    split = split.astype(jnp.float32)
    N, C = outputs.shape

    def penalty_env(scale):
        logits = outputs * scale
        ce = -jax.nn.log_softmax(logits, axis=-1)[jnp.arange(N), labels]
        return (split * ce[:, None] / N).sum(0)

    ce0 = -jax.nn.log_softmax(outputs, axis=-1)[jnp.arange(N), labels]
    erm = (split * ce0[:, None] / N).sum(0).sum()
    scale = jnp.ones((1, C), jnp.float32)
    J = jax.jacrev(penalty_env)(scale)                # (E, 1, C)
    pen = jnp.sum(J ** 2)
    return erm + 10.0 * pen, erm, pen


if __name__ == "__main__":
    key = jax.random.PRNGKey(0)

    def run_case(case_key, N, C, E, S, idx, tile_n, in_dtype):
        k1, k2, k3 = jax.random.split(case_key, 3)
        outputs = jax.random.normal(k1, (N, C), dtype=jnp.float32)
        labels = jax.random.randint(k2, (N,), 0, C, dtype=jnp.int32)
        env_ids = jax.random.randint(k3, (S, N), 0, E, dtype=jnp.int32)
        split_all = jax.nn.one_hot(env_ids, E, dtype=jnp.float32)   # (S, N, E)

        outputs_in = outputs.astype(in_dtype)
        split_in = split_all.astype(in_dtype)

        final, erm, pen = irm_loss_pallas(outputs_in, labels, split_in, idx,
                                          tile_n=tile_n)
        jax.block_until_ready((final, erm, pen))

        rf, re, rp = irm_loss_ref(outputs_in.astype(jnp.float32), labels,
                                  split_in[idx].astype(jnp.float32))
        assert jnp.allclose(final, rf, rtol=1e-4, atol=1e-5), (final, rf)
        assert jnp.allclose(erm, re, rtol=1e-4, atol=1e-5), (erm, re)
        assert jnp.allclose(pen, rp, rtol=1e-4, atol=1e-5), (pen, rp)

    k1, k2, k3 = jax.random.split(key, 3)
    # Multi-tile grid (two full batch tiles).
    run_case(k1, N=16, C=4, E=4, S=3, idx=1, tile_n=8, in_dtype=jnp.float32)
    # Partial last tile (N not a multiple of TILE_N) exercises the row masking.
    run_case(k2, N=20, C=5, E=3, S=2, idx=0, tile_n=8, in_dtype=jnp.float32)
    # bf16 inputs (no wrapper cast; upcast happens inside the kernel).
    run_case(k3, N=16, C=4, E=4, S=3, idx=2, tile_n=512, in_dtype=jnp.bfloat16)

    print("KERNEL_OK")
</pallas_src>

<mosaic_0001>
module attributes {stable_mosaic.version = 11 : i64} {
  func.func @_irm_kernel(%arg0: i32, %arg1: memref<1xi32, #tpu.memory_space<smem>>, %arg2: memref<8x4xf32, #tpu.memory_space<vmem>>, %arg3: memref<8x1xi32, #tpu.memory_space<vmem>>, %arg4: memref<1x8x4xf32, #tpu.memory_space<vmem>>, %arg5: memref<1x128xf32, #tpu.memory_space<vmem>>, %arg6: memref<4x4xf32, #tpu.memory_space<vmem>>, %arg7: memref<1x1xf32, #tpu.memory_space<vmem>>) attributes {dimension_semantics = [#tpu.dimension_semantics<arbitrary>], iteration_bounds = array<i64: 2>, scalar_prefetch = 1 : i64, scratch_operands = 2 : i64, tpu.core_type = #tpu.core_type<tc>, window_params = [{transform_indices = @transform_0, window_bounds = array<i64: 8, 4>}, {transform_indices = @transform_1, window_bounds = array<i64: 8, 1>}, {transform_indices = @transform_2, window_bounds = array<i64: 1, 8, 4>}, {pipeline_mode = #tpu.pipeline_mode<synchronous>, transform_indices = @transform_3, window_bounds = array<i64: 1, 128>}]} {
    %c0_i32 = arith.constant 0 : i32
    %0 = arith.cmpi eq, %arg0, %c0_i32 : i32
    %1 = arith.extui %0 : i1 to i32
    %c0_i32_0 = arith.constant 0 : i32
    %2 = arith.cmpi ne, %1, %c0_i32_0 : i32
    scf.if %2 {
      %cst_26 = arith.constant 0.000000e+00 : f32
      %67 = vector.broadcast %cst_26 : f32 to vector<4x4xf32>
      %c0_27 = arith.constant 0 : index
      %c0_28 = arith.constant 0 : index
      %68 = vector.load %arg6[%c0_27, %c0_28] : memref<4x4xf32, #tpu.memory_space<vmem>>, vector<4x4xf32>
      tpu.vector_store %arg6[%c0_27, %c0_28], %67 {strides = array<i32>} : memref<4x4xf32, #tpu.memory_space<vmem>>, vector<4x4xf32>,
      %cst_29 = arith.constant 0.000000e+00 : f32
      %69 = vector.broadcast %cst_29 : f32 to vector<1x1xf32>
      %c0_30 = arith.constant 0 : index
      %c0_31 = arith.constant 0 : index
      %70 = vector.load %arg7[%c0_30, %c0_31] : memref<1x1xf32, #tpu.memory_space<vmem>>, vector<1x1xf32>
      tpu.vector_store %arg7[%c0_30, %c0_31], %69 {strides = array<i32>} : memref<1x1xf32, #tpu.memory_space<vmem>>, vector<1x1xf32>,
    } else {
    }
    %c0 = arith.constant 0 : index
    %c0_1 = arith.constant 0 : index
    %3 = vector.load %arg2[%c0, %c0_1] : memref<8x4xf32, #tpu.memory_space<vmem>>, vector<8x4xf32>
    %c0_2 = arith.constant 0 : index
    %c0_3 = arith.constant 0 : index
    %4 = vector.load %arg3[%c0_2, %c0_3] : memref<8x1xi32, #tpu.memory_space<vmem>>, vector<8x1xi32>
    %c0_4 = arith.constant 0 : index
    %c0_5 = arith.constant 0 : index
    %c0_6 = arith.constant 0 : index
    %5 = vector.load %arg4[%c0_4, %c0_5, %c0_6] : memref<1x8x4xf32, #tpu.memory_space<vmem>>, vector<1x8x4xf32>
    %6 = vector.shape_cast %5 : vector<1x8x4xf32> to vector<8x4xf32>
    %c8_i32 = arith.constant 8 : i32
    %7 = arith.muli %arg0, %c8_i32 : i32
    %8 = tpu.iota {dimensions = array<i32: 0>} : vector<8x1xi32>
    %9 = vector.broadcast %7 : i32 to vector<8x1xi32>
    %10 = arith.addi %9, %8 : vector<8x1xi32>
    %c16_i32 = arith.constant 16 : i32
    %11 = vector.broadcast %c16_i32 : i32 to vector<8x1xi32>
    %12 = arith.cmpi slt, %10, %11 : vector<8x1xi32>
    %cst = arith.constant dense<0xFF800000> : vector<8xf32>
    %13 = vector.multi_reduction <maximumf>, %3, %cst [1] : vector<8x4xf32> to vector<8xf32>
    %14 = vector.shape_cast %13 : vector<8xf32> to vector<8x1xf32>
    %15 = vector.broadcast %14 : vector<8x1xf32> to vector<8x4xf32>
    %16 = arith.subf %3, %15 : vector<8x4xf32>
    %17 = math.exp %16 : vector<8x4xf32>
    %cst_7 = arith.constant dense<0.000000e+00> : vector<8xf32>
    %18 = vector.multi_reduction <add>, %17, %cst_7 [1] : vector<8x4xf32> to vector<8xf32>
    %19 = vector.shape_cast %18 : vector<8xf32> to vector<8x1xf32>
    %20 = math.log %19 : vector<8x1xf32>
    %21 = arith.addf %20, %14 : vector<8x1xf32>
    %22 = tpu.reciprocal %19 : vector<8x1xf32> -> vector<8x1xf32>
    %23 = vector.broadcast %22 : vector<8x1xf32> to vector<8x4xf32>
    %24 = arith.mulf %17, %23 : vector<8x4xf32>
    %25 = tpu.iota {dimensions = array<i32: 1>} : vector<8x4xi32>
    %26 = vector.broadcast %4 : vector<8x1xi32> to vector<8x4xi32>
    %27 = arith.cmpi eq, %25, %26 : vector<8x4xi32>
    %28 = arith.extui %27 : vector<8x4xi1> to vector<8x4xi32>
    %29 = arith.sitofp %28 : vector<8x4xi32> to vector<8x4xf32>
    %30 = arith.mulf %3, %29 : vector<8x4xf32>
    %cst_8 = arith.constant dense<0.000000e+00> : vector<8xf32>
    %31 = vector.multi_reduction <add>, %30, %cst_8 [1] : vector<8x4xf32> to vector<8xf32>
    %32 = vector.shape_cast %31 : vector<8xf32> to vector<8x1xf32>
    %33 = arith.subf %21, %32 : vector<8x1xf32>
    %34 = arith.subf %24, %29 : vector<8x4xf32>
    %35 = arith.mulf %34, %3 : vector<8x4xf32>
    %cst_9 = arith.constant 0.000000e+00 : f32
    %36 = vector.broadcast %cst_9 : f32 to vector<8x1xf32>
    %37 = arith.select %12, %33, %36 : vector<8x1xi1>, vector<8x1xf32>
    %cst_10 = arith.constant 0.000000e+00 : f32
    %38 = vector.shape_cast %12 : vector<8x1xi1> to vector<8x1xi1>
    %39 = vector.broadcast %38 : vector<8x1xi1> to vector<8x4xi1>
    %40 = vector.broadcast %cst_10 : f32 to vector<8x4xf32>
    %41 = arith.select %39, %35, %40 : vector<8x4xi1>, vector<8x4xf32>
    %cst_11 = arith.constant 0.000000e+00 : f32
    %42 = vector.shape_cast %12 : vector<8x1xi1> to vector<8x1xi1>
    %43 = vector.broadcast %42 : vector<8x1xi1> to vector<8x4xi1>
    %44 = vector.broadcast %cst_11 : f32 to vector<8x4xf32>
    %45 = arith.select %43, %6, %44 : vector<8x4xi1>, vector<8x4xf32>
    %c0_12 = arith.constant 0 : index
    %c0_13 = arith.constant 0 : index
    %46 = vector.load %arg6[%c0_12, %c0_13] : memref<4x4xf32, #tpu.memory_space<vmem>>, vector<4x4xf32>
    %cst_14 = arith.constant dense<0.000000e+00> : vector<4x4xf32>
    %47 = tpu.matmul %45, %41, %cst_14 {dimension_numbers = #tpu.dot_dimension_numbers<[0], [0], [1], [1], [0, 1, 1, 1], [], []>} : vector<8x4xf32>, vector<8x4xf32>, vector<4x4xf32> -> vector<4x4xf32>
    %cst_15 = arith.constant 6.250000e-02 : f32
    %48 = vector.broadcast %cst_15 : f32 to vector<4x4xf32>
    %49 = arith.mulf %48, %47 : vector<4x4xf32>
    %50 = arith.addf %46, %49 : vector<4x4xf32>
    %c0_16 = arith.constant 0 : index
    %c0_17 = arith.constant 0 : index
    %51 = vector.load %arg6[%c0_16, %c0_17] : memref<4x4xf32, #tpu.memory_space<vmem>>, vector<4x4xf32>
    tpu.vector_store %arg6[%c0_16, %c0_17], %50 {strides = array<i32>} : memref<4x4xf32, #tpu.memory_space<vmem>>, vector<4x4xf32>,
    %c0_18 = arith.constant 0 : index
    %c0_19 = arith.constant 0 : index
    %52 = vector.load %arg7[%c0_18, %c0_19] : memref<1x1xf32, #tpu.memory_space<vmem>>, vector<1x1xf32>
    %cst_20 = arith.constant dense<0.000000e+00> : vector<8xf32>
    %53 = vector.multi_reduction <add>, %45, %cst_20 [1] : vector<8x4xf32> to vector<8xf32>
    %54 = vector.shape_cast %53 : vector<8xf32> to vector<8x1xf32>
    %55 = arith.mulf %37, %54 : vector<8x1xf32>
    %56 = vector.shape_cast %55 : vector<8x1xf32> to vector<1x8x1xf32>
    %cst_21 = arith.constant dense<0.000000e+00> : vector<1xf32>
    %57 = vector.multi_reduction <add>, %56, %cst_21 [1, 2] : vector<1x8x1xf32> to vector<1xf32>
    %58 = vector.shape_cast %57 : vector<1xf32> to vector<1x1x1xf32>
    %59 = vector.extract %58[0, 0, 0] : f32 from vector<1x1x1xf32>
    %cst_22 = arith.constant 6.250000e-02 : f32
    %60 = arith.mulf %cst_22, %59 : f32
    %61 = vector.broadcast %60 : f32 to vector<1x1xf32>
    %62 = arith.addf %52, %61 : vector<1x1xf32>
    %c0_23 = arith.constant 0 : index
    %c0_24 = arith.constant 0 : index
    %63 = vector.load %arg7[%c0_23, %c0_24] : memref<1x1xf32, #tpu.memory_space<vmem>>, vector<1x1xf32>
    tpu.vector_store %arg7[%c0_23, %c0_24], %62 {strides = array<i32>} : memref<1x1xf32, #tpu.memory_space<vmem>>, vector<1x1xf32>,
    %c1_i32 = arith.constant 1 : i32
    %64 = arith.cmpi eq, %arg0, %c1_i32 : i32
    %65 = arith.extui %64 : i1 to i32
    %c0_i32_25 = arith.constant 0 : i32
    %66 = arith.cmpi ne, %65, %c0_i32_25 : i32
    scf.if %66 {
      %c0_26 = arith.constant 0 : index
      %c0_27 = arith.constant 0 : index
      %67 = vector.load %arg6[%c0_26, %c0_27] : memref<4x4xf32, #tpu.memory_space<vmem>>, vector<4x4xf32>
      %68 = arith.mulf %67, %67 : vector<4x4xf32>
      %69 = vector.shape_cast %68 : vector<4x4xf32> to vector<1x4x4xf32>
      %cst_28 = arith.constant dense<0.000000e+00> : vector<1xf32>
      %70 = vector.multi_reduction <add>, %69, %cst_28 [1, 2] : vector<1x4x4xf32> to vector<1xf32>
      %71 = vector.shape_cast %70 : vector<1xf32> to vector<1x1x1xf32>
      %72 = vector.extract %71[0, 0, 0] : f32 from vector<1x1x1xf32>
      %c0_29 = arith.constant 0 : index
      %c0_30 = arith.constant 0 : index
      %73 = vector.load %arg7[%c0_29, %c0_30] : memref<1x1xf32, #tpu.memory_space<vmem>>, vector<1x1xf32>
      %74 = vector.shape_cast %73 : vector<1x1xf32> to vector<1x1x1xf32>
      %cst_31 = arith.constant dense<0.000000e+00> : vector<1xf32>
      %75 = vector.multi_reduction <add>, %74, %cst_31 [1, 2] : vector<1x1x1xf32> to vector<1xf32>
      %76 = vector.shape_cast %75 : vector<1xf32> to vector<1x1x1xf32>
      %77 = vector.extract %76[0, 0, 0] : f32 from vector<1x1x1xf32>
      %cst_32 = arith.constant 1.000000e+01 : f32
      %78 = arith.mulf %cst_32, %72 : f32
      %79 = arith.addf %77, %78 : f32
      %80 = tpu.iota {dimensions = array<i32: 1>} : vector<1x128xi32>
      %c0_i32_33 = arith.constant 0 : i32
      %81 = vector.broadcast %c0_i32_33 : i32 to vector<1x128xi32>
      %82 = arith.cmpi eq, %80, %81 : vector<1x128xi32>
      %c1_i32_34 = arith.constant 1 : i32
      %83 = vector.broadcast %c1_i32_34 : i32 to vector<1x128xi32>
      %84 = arith.cmpi eq, %80, %83 : vector<1x128xi32>
      %c2_i32 = arith.constant 2 : i32
      %85 = vector.broadcast %c2_i32 : i32 to vector<1x128xi32>
      %86 = arith.cmpi eq, %80, %85 : vector<1x128xi32>
      %cst_35 = arith.constant 0.000000e+00 : f32
      %87 = vector.broadcast %72 : f32 to vector<1x128xf32>
      %88 = vector.broadcast %cst_35 : f32 to vector<1x128xf32>
      %89 = arith.select %86, %87, %88 : vector<1x128xi1>, vector<1x128xf32>
      %90 = vector.broadcast %77 : f32 to vector<1x128xf32>
      %91 = arith.select %84, %90, %89 : vector<1x128xi1>, vector<1x128xf32>
      %92 = vector.broadcast %79 : f32 to vector<1x128xf32>
      %93 = arith.select %82, %92, %91 : vector<1x128xi1>, vector<1x128xf32>
      %c0_36 = arith.constant 0 : index
      %c0_37 = arith.constant 0 : index
      %94 = vector.load %arg5[%c0_36, %c0_37] : memref<1x128xf32, #tpu.memory_space<vmem>>, vector<1x128xf32>
      tpu.vector_store %arg5[%c0_36, %c0_37], %93 {strides = array<i32>} : memref<1x128xf32, #tpu.memory_space<vmem>>, vector<1x128xf32>,
    } else {
    }
    return
  }
  func.func @transform_0(%arg0: i32, %arg1: memref<1xi32, #tpu.memory_space<smem>>) -> (i32, i32) {
    %c0_i32 = arith.constant 0 : i32
    %c0_i32_0 = arith.constant 0 : i32
    return %arg0, %c0_i32 : i32, i32
  }
  func.func @transform_1(%arg0: i32, %arg1: memref<1xi32, #tpu.memory_space<smem>>) -> (i32, i32) {
    %c0_i32 = arith.constant 0 : i32
    %c0_i32_0 = arith.constant 0 : i32
    return %arg0, %c0_i32 : i32, i32
  }
  func.func @transform_2(%arg0: i32, %arg1: memref<1xi32, #tpu.memory_space<smem>>) -> (i32, i32, i32) {
    %c0 = arith.constant 0 : index
    %0 = memref.load %arg1[%c0] : memref<1xi32, #tpu.memory_space<smem>>
    %c0_i32 = arith.constant 0 : i32
    %c0_i32_0 = arith.constant 0 : i32
    return %0, %arg0, %c0_i32 : i32, i32, i32
  }
  func.func @transform_3(%arg0: i32, %arg1: memref<1xi32, #tpu.memory_space<smem>>) -> (i32, i32) {
    %c0_i32 = arith.constant 0 : i32
    %c0_i32_0 = arith.constant 0 : i32
    %c0_i32_1 = arith.constant 0 : i32
    return %c0_i32, %c0_i32_0 : i32, i32
  }
}

</mosaic_0001>

<llo_original>
// kernel: tpu_custom_call.1
$region0: #{tpu_custom_call.1}
  #allocation0 [shape = 'u32[]', space=smem, size = 0x4, offset = 0x4, fixed_abs, tag = 'smem constant byte address 0x4 - core index']
  #allocation1 [shape = 'u32[144,128]{1,0:T(1,128)}', space=vmem, size = 0x12000, scoped, tag = 'internal scratch']
  #allocation2 [shape = 'f32[4,4]{1,0:T(4,128)}', space=vmem, size = 0x800, scoped, tag = 'scratch operand']
  #allocation3 [shape = 'f32[1,1]{1,0:T(1,128)}', space=vmem, size = 0x200, scoped, tag = 'scratch operand']
  #allocation4 [shape = 's32[1]{0}', space=sflag, size = 0x4, scoped, tag = 'scoped memory for tpu_custom_call.1']
  #allocation5 [shape = 's32[1]{0:T(128)S(6)}', space=smem, size = 0x200, scoped, tag = 'prefetched SMEM operand 0']
  %s0 = inlined_call_operand.<no memory space> [shape: s32[1], index: 0, kind: input, shape index: {}]
  %s1 = inlined_call_operand.vmem [shape: f32[16,4], index: 1, kind: input, shape index: {}]
  %s2 = inlined_call_operand.vmem [shape: s32[16,1], index: 2, kind: input, shape index: {}]
  %s3 = inlined_call_operand.vmem [shape: f32[3,16,4], index: 3, kind: input, shape index: {}]
  %s4 = inlined_call_operand.hbm [shape: f32[1,128], index: 4, kind: output, shape index: {}]
  %s5 = sld [smem:[#allocation0]]
  $region53: #{tpu_custom_call.1} parent=0
    _
  %s7 = ssub.s32 1, %s5
  %s8 = scalar_select 0, %s7, %s5
  %9 = sst [smem:[#allocation5]] %s0
  $region1: #{tpu_custom_call.1} parent=0
    #allocation6 [shape = 'u8[512]{0}', space=vmem, size = 0x400, scoped, tag = 'output window, operand 0, single buffered']
    #allocation7 [shape = 's32[2]{0}', space=sflag, size = 0x8, scoped, tag = 'scoped memory for tpu_custom_call.1']
    %10 = vsyncpa [#allocation7], 0
    loop: start=0, step=1, limit=4
    $region2: #{tpu_custom_call.1} parent=1 // loop_pre_header
      _
    $region3: #{tpu_custom_call.1} parent=1 // loop_header
      %s12 = sphi 0, %s16
      %p13 = scmp.ge.s32.totalorder %s12, 4
      %s22 = sphi 0, %s24
      %s25 = sphi 0, %s22
      %s26 = sphi 0, %s25
      %s42 = sphi 0, %s26
      %s48 = sphi 0, %s50
      %s51 = sphi 0, %s48
      %s52 = sphi 0, %s51
      %s68 = sphi 0, %s52
      %s78 = sphi 0, %s80
      %s81 = sphi 0, %s78
      %s82 = sphi 0, %s81
      %s98 = sphi 0, %s82
      %s102 = sphi 0, %s102
      %s104 = sphi 0, %s102
      %s105 = sphi 0, %s104
      %s119 = sphi 0, %s105
    $region4: #{tpu_custom_call.1} parent=1 // loop_header_branch
      %15 = sbr.rel (%p13) target = $region8
    $region5: #{tpu_custom_call.1} parent=1 // loop_body
      %s17 = ssub.s32 %s12, 1
      %s18 = ssub.s32 %s12, 2
      %s19 = sadd.s32 %s12, 1
      %s20 = ssub.s32 %s12, %s19
      %p21 = scmp.eq.s32.totalorder %s20, 0
      %s23 = sadd.s32 %s22, 1
      %s24 = scalar_select %p21, %s22, %s23
      %p27 = pneg %p21
      %p28 = scmp.eq.s32.totalorder %s12, 1
      %p29 = por %p27, %p28
      %p30 = scmp.ne.s32.totalorder %s22, %s25
      %p31 = scmp.eq.s32.totalorder %s12, 0
      %p32 = por %p30, %p31
      %p33 = scmp.ne.s32.totalorder %s22, %s25
      %p34 = scmp.eq.s32.totalorder %s17, 1
      %p35 = por %p33, %p34
      %p36 = scmp.ne.s32.totalorder %s25, %s26
      %p37 = scmp.eq.s32.totalorder %s17, 0
      %p38 = por %p36, %p37
      %p39 = scmp.ne.s32.totalorder %s25, %s26
      %p40 = scmp.eq.s32.totalorder %s18, 1
      %p41 = por %p39, %p40
      %p43 = scmp.ne.s32.totalorder %s26, %s42
      %p44 = scmp.eq.s32.totalorder %s18, 0
      %p45 = por %p43, %p44
      %s46 = ssub.s32 %s12, %s19
      %p47 = scmp.eq.s32.totalorder %s46, 0
      %s49 = sadd.s32 %s48, 1
      %s50 = scalar_select %p47, %s48, %s49
      %p53 = pneg %p47
      %p54 = scmp.eq.s32.totalorder %s12, 1
      %p55 = por %p53, %p54
      %p56 = scmp.ne.s32.totalorder %s48, %s51
      %p57 = scmp.eq.s32.totalorder %s12, 0
      %p58 = por %p56, %p57
      %p59 = scmp.ne.s32.totalorder %s48, %s51
      %p60 = scmp.eq.s32.totalorder %s17, 1
      %p61 = por %p59, %p60
      %p62 = scmp.ne.s32.totalorder %s51, %s52
      %p63 = scmp.eq.s32.totalorder %s17, 0
      %p64 = por %p62, %p63
      %p65 = scmp.ne.s32.totalorder %s51, %s52
      %p66 = scmp.eq.s32.totalorder %s18, 1
      %p67 = por %p65, %p66
      %p69 = scmp.ne.s32.totalorder %s52, %s68
      %p70 = scmp.eq.s32.totalorder %s18, 0
      %p71 = por %p69, %p70
      %s72 = sld [smem:[#allocation5]]
      %s73 = sld [smem:[#allocation5]]
      %s74 = ssub.s32 %s72, %s73
      %s75 = ssub.s32 %s12, %s19
      %s76 = sor.u32 %s74, %s75
      %p77 = scmp.eq.s32.totalorder %s76, 0
      %s79 = sadd.s32 %s78, 1
      %s80 = scalar_select %p77, %s78, %s79
      %p83 = pneg %p77
      %p84 = scmp.eq.s32.totalorder %s12, 1
      %p85 = por %p83, %p84
      %p86 = scmp.ne.s32.totalorder %s78, %s81
      %p87 = scmp.eq.s32.totalorder %s12, 0
      %p88 = por %p86, %p87
      %p89 = scmp.ne.s32.totalorder %s78, %s81
      %p90 = scmp.eq.s32.totalorder %s17, 1
      %p91 = por %p89, %p90
      %p92 = scmp.ne.s32.totalorder %s81, %s82
      %p93 = scmp.eq.s32.totalorder %s17, 0
      %p94 = por %p92, %p93
      %p95 = scmp.ne.s32.totalorder %s81, %s82
      %p96 = scmp.eq.s32.totalorder %s18, 1
      %p97 = por %p95, %p96
      %p99 = scmp.ne.s32.totalorder %s82, %s98
      %p100 = scmp.eq.s32.totalorder %s18, 0
      %p101 = por %p99, %p100
      %s103 = sadd.s32 %s102, 1
      %p106 = scmp.eq.s32.totalorder %s12, 1
      %p107 = scmp.ne.s32.totalorder %s102, %s104
      %p108 = scmp.eq.s32.totalorder %s12, 0
      %p109 = por %p107, %p108
      %p110 = scmp.ne.s32.totalorder %s102, %s104
      %p111 = scmp.eq.s32.totalorder %s17, 1
      %p112 = por %p110, %p111
      %p113 = scmp.ne.s32.totalorder %s104, %s105
      %p114 = scmp.eq.s32.totalorder %s17, 0
      %p115 = por %p113, %p114
      %p116 = scmp.ne.s32.totalorder %s104, %s105
      %p117 = scmp.eq.s32.totalorder %s18, 1
      %p118 = por %p116, %p117
      %p120 = scmp.ne.s32.totalorder %s105, %s119
      %p121 = scmp.eq.s32.totalorder %s18, 0
      %p122 = por %p120, %p121
      %p123 = scmp.le.s32.totalorder 1, %s12
      %p124 = scmp.lt.s32.totalorder %s12, 3
      %p125 = pnand %p123, %p124
      %p126 = pneg %p125
      // Predicated region
      $region9: #{tpu_custom_call.1} parent=5 // pred_check
        _
      $region10: #{tpu_custom_call.1} parent=5 // pred_check_branch
        %128 = sbr.rel (%p125) target = $region12
      $region11: #{tpu_custom_call.1} parent=5 // pred_region
        %s129 = ssub.s32 %s12, 1
      $region12: #{tpu_custom_call.1} parent=5 // pred_fallthru
        _
      %p130 = scmp.lt.s32.totalorder %s12, 2
      // Predicated region
      $region13: #{tpu_custom_call.1} parent=5 // pred_check
        %p131 = pneg %p130
      $region14: #{tpu_custom_call.1} parent=5 // pred_check_branch
        %133 = sbr.rel (%p131) target = $region16
      $region15: #{tpu_custom_call.1} parent=5 // pred_region
        // Predicated region
        $region17: #{tpu_custom_call.1} parent=15 // pred_check
          %p134 = pneg %p32
        $region18: #{tpu_custom_call.1} parent=15 // pred_check_branch
          %136 = sbr.rel (%p134) target = $region20
        $region19: #{tpu_custom_call.1} parent=15 // pred_region
          %p137 = scmp.lt.s32.totalorder %s12, 1
          %s138 = scalar_select %p137, %s12, 1
          %s139 = smul.addr %s138, 8
          %s140 = scalar_lea.vmem %s1, %s139
        $region20: #{tpu_custom_call.1} parent=15 // pred_fallthru
          _
        // Predicated region
        $region21: #{tpu_custom_call.1} parent=15 // pred_check
          %p141 = pneg %p58
        $region22: #{tpu_custom_call.1} parent=15 // pred_check_branch
          %143 = sbr.rel (%p141) target = $region24
        $region23: #{tpu_custom_call.1} parent=15 // pred_region
          %p144 = scmp.lt.s32.totalorder %s12, 1
          %s145 = scalar_select %p144, %s12, 1
          %s146 = smul.addr %s145, 8
          %s147 = scalar_lea.vmem %s2, %s146
        $region24: #{tpu_custom_call.1} parent=15 // pred_fallthru
          _
        // Predicated region
        $region25: #{tpu_custom_call.1} parent=15 // pred_check
          %p148 = pneg %p88
        $region26: #{tpu_custom_call.1} parent=15 // pred_check_branch
          %150 = sbr.rel (%p148) target = $region28
        $region27: #{tpu_custom_call.1} parent=15 // pred_region
          %s151 = sld [smem:[#allocation5]]
          %p152 = scmp.lt.s32.totalorder %s151, 2
          %s153 = scalar_select %p152, %s151, 2
          %p154 = scmp.lt.s32.totalorder %s12, 1
          %s155 = scalar_select %p154, %s12, 1
          %s156 = smul.addr %s153, 2
          %s157 = sadd.s32 %s155, %s156
          %s158 = smul.addr %s157, 8
          %s159 = scalar_lea.vmem %s3, %s158
          %s160 = sld [smem:[#allocation5]]
        $region28: #{tpu_custom_call.1} parent=15 // pred_fallthru
          _
      $region16: #{tpu_custom_call.1} parent=5 // pred_fallthru
        _
      %p161 = scmp.le.s32.totalorder 1, %s12
      %p162 = scmp.lt.s32.totalorder %s12, 3
      %p163 = pnand %p161, %p162
      %p164 = pneg %p163
      // Predicated region
      $region29: #{tpu_custom_call.1} parent=5 // pred_check
        _
      $region30: #{tpu_custom_call.1} parent=5 // pred_check_branch
        %166 = sbr.rel (%p163) target = $region32
      $region31: #{tpu_custom_call.1} parent=5 // pred_region
        %s167 = ssub.s32 %s12, 1
        %p168 = scmp.lt.s32.totalorder %s17, 1
        %s169 = scalar_select %p168, %s17, 1
        %s170 = smul.addr %s169, 8
        %s171 = scalar_lea.vmem %s1, %s170
        %p172 = pneg %p38
        %p173 = pneg %p35
        %p174 = scmp.lt.s32.totalorder %s17, 1
        %s175 = scalar_select %p174, %s17, 1
        %s176 = smul.addr %s175, 8
        %s177 = scalar_lea.vmem %s2, %s176
        %p178 = pneg %p64
        %p179 = pneg %p61
        %s180 = sld [smem:[#allocation5]]
        %p181 = scmp.lt.s32.totalorder %s180, 2
        %s182 = scalar_select %p181, %s180, 2
        %p183 = scmp.lt.s32.totalorder %s17, 1
        %s184 = scalar_select %p183, %s17, 1
        %s185 = smul.addr %s182, 2
        %s186 = sadd.s32 %s184, %s185
        %s187 = smul.addr %s186, 8
        %s188 = scalar_lea.vmem %s3, %s187
        %p189 = pneg %p94
        %p190 = pneg %p91
        %p191 = pneg %p115
        %p192 = pneg %p112
        %p193 = scmp.lt.s32.totalorder %s17, 1
        %s194 = scalar_select %p193, %s17, 1
        %s195 = smul.addr %s194, 8
        %s196 = scalar_lea.vmem %s1, %s195
        %p197 = scmp.lt.s32.totalorder %s17, 1
        %s198 = scalar_select %p197, %s17, 1
        %s199 = smul.addr %s198, 8
        %s200 = scalar_lea.vmem %s2, %s199
        %s201 = sld [smem:[#allocation5]]
        %p202 = scmp.lt.s32.totalorder %s201, 2
        %s203 = scalar_select %p202, %s201, 2
        %p204 = scmp.lt.s32.totalorder %s17, 1
        %s205 = scalar_select %p204, %s17, 1
        %s206 = smul.addr %s203, 2
        %s207 = sadd.s32 %s205, %s206
        %s208 = smul.addr %s207, 8
        %s209 = scalar_lea.vmem %s3, %s208
        %s210 = sld [smem:[#allocation5]]
        %p211 = scmp.eq.s32.totalorder %s17, 0
        // Predicated region
        $region33: #{tpu_custom_call.1} parent=31 // pred_check
          %p212 = pneg %p211
        $region34: #{tpu_custom_call.1} parent=31 // pred_check_branch
          %214 = sbr.rel (%p212) target = $region36
        $region35: #{tpu_custom_call.1} parent=31 // pred_region
          %vm215 = vcmask 27648
          %216 = vst.msk [vmem:[#allocation2] sm:$0xf] %vm215, 0.0
          %vm217 = vcmask 0
          %218 = vst.msk [vmem:[#allocation3] sm:$0x1] %vm217, 0.0
        $region36: #{tpu_custom_call.1} parent=31 // pred_fallthru
          _
        %v219 = vld [vmem:[%s196] sm:$0xff]
        %v220 = vld [vmem:[%s200] sm:$0xff]
        %v221 = vld [vmem:[%s209] sm:$0xff]
        %s222 = smul.u32 %s17, 8
        %v223 = vlaneseq
        %v224 = vshrl.u32 %v223, 7
        %v225 = vstv %s222
        %v226 = vadd.s32 %v225, %v224
        %vm227 = vcmp.lt.s32.totalorder %v226, 16
        %vm228 = vcmask 31744
        %v229 = vsel %vm228, %v219, -inf
        %230 = vmax.xlane.f32.xlu0 %v229
        %v231 = vpop.xlane.xlu0 %230
        %v232 = vsub.f32 %v219, %v231
        %v233 = vmul.f32 %v232, 1.442695
        %v234 = vpow.pop %v233
        %v235 = vsel %vm228, %v234, 0.0
        %236 = vadd.xlane.f32.xlu0 %v235
        %v237 = vpop.xlane.xlu0 %236
        %v238 = vlog2.pop %v237
        %v239 = vmul.f32 %v238, 0.6931472
        %v240 = vadd.f32 %v239, %v231
        %v241 = vrcp.pop %v237
        %v242 = vmul.f32 %v234, %v241
        %v243 = vlaneseq
        %v244 = vand.u32 %v243, 127
        %245 = vset.pattern.permute.xlu0 0
        %246 = vperm.xlu0 %245, %v220
        %v247 = vpop.permute.xlu0 %246
        %vm248 = vcmp.eq.s32.totalorder %v244, %v247
        %v249 = vsel %vm248, 1, 0
        %v250 = vcvt.s32.f32 %v249
        %v251 = vmul.f32 %v219, %v250
        %v252 = vsel %vm228, %v251, 0.0
        %253 = vadd.xlane.f32.xlu0 %v252
        %v254 = vpop.xlane.xlu0 %253
        %v255 = vsub.f32 %v240, %v254
        %v256 = vsub.f32 %v242, %v250
        %v257 = vmul.f32 %v256, %v219
        %v258 = vsel %vm227, %v255, 0.0
        %v259 = vsel %vm227, 1, 0
        %vm260 = vcmp.eq.s32.totalorder %v259, 1
        %v261 = vsel %vm260, %v257, 0.0
        %v262 = vsel %vm260, %v221, 0.0
        %v263 = vld [vmem:[#allocation2] sm:$0xf]
        %264 = vxpose.xlu0.b32.start [1/16] %v262, 128
        %265 = vxpose.xlu0.b32.cont [2/16] 0.0, 128
        %266 = vxpose.xlu0.b32.cont [3/16] 0.0, 128
        %267 = vxpose.xlu0.b32.cont [4/16] 0.0, 128
        %268 = vxpose.xlu0.b32.cont [5/16] 0.0, 128
        %269 = vxpose.xlu0.b32.cont [6/16] 0.0, 128
        %270 = vxpose.xlu0.b32.cont [7/16] 0.0, 128
        %271 = vxpose.xlu0.b32.cont [8/16] 0.0, 128
        %272 = vxpose.xlu0.b32.cont [9/16] 0.0, 128
        %273 = vxpose.xlu0.b32.cont [10/16] 0.0, 128
        %274 = vxpose.xlu0.b32.cont [11/16] 0.0, 128
        %275 = vxpose.xlu0.b32.cont [12/16] 0.0, 128
        %276 = vxpose.xlu0.b32.cont [13/16] 0.0, 128
        %277 = vxpose.xlu0.b32.cont [14/16] 0.0, 128
        %278 = vxpose.xlu0.b32.cont [15/16] 0.0, 128
        %279 = vxpose.xlu0.b32.end [16/16] 0.0, 128
        %v280 = vpop.trf.xlu0
        %v281 = vpop.trf.xlu0
        %v282 = vpop.trf.xlu0
        %v283 = vpop.trf.xlu0
        %v284 = vpop.trf.xlu0
        %v285 = vpop.trf.xlu0
        %v286 = vpop.trf.xlu0
        %v287 = vpop.trf.xlu0
        %v288 = vpop.trf.xlu0
        %v289 = vpop.trf.xlu0
        %v290 = vpop.trf.xlu0
        %v291 = vpop.trf.xlu0
        %v292 = vpop.trf.xlu0
        %v293 = vpop.trf.xlu0
        %v294 = vpop.trf.xlu0
        %v295 = vpop.trf.xlu0
        %vm296 = vcmask 64512
        %v298 = vsel %vm296, %v280, 0
        %300 = vmatprep.subr.mxu0 0.0
        %301 = vmatpush1.msra.mxu0 0.0
        %302 = vmatprep.subr.mxu0 0.0
        %303 = vmatpush1.msra.mxu0 0.0
        %304 = vmatprep.subr.mxu0 0.0
        %305 = vmatpush1.msra.mxu0 0.0
        %306 = vmatprep.subr.mxu0 0.0
        %307 = vmatpush1.msra.mxu0 0.0
        %308 = vmatprep.subr.mxu0 0.0
        %309 = vmatpush1.msra.mxu0 0.0
        %310 = vmatprep.subr.mxu0 0.0
        %311 = vmatpush1.msra.mxu0 0.0
        %312 = vmatprep.subr.mxu0 0.0
        %313 = vmatpush1.msra.mxu0 0.0
        %314 = vmatprep.subr.mxu0 0.0
        %315 = vmatpush1.msra.mxu0 0.0
        %316 = vmatprep.subr.mxu0 0.0
        %317 = vmatpush1.msra.mxu0 0.0
        %318 = vmatprep.subr.mxu0 0.0
        %319 = vmatpush1.msra.mxu0 0.0
        %320 = vmatprep.subr.mxu0 0.0
        %321 = vmatpush1.msra.mxu0 0.0
        %322 = vmatprep.subr.mxu0 0.0
        %323 = vmatpush1.msra.mxu0 0.0
        %324 = vmatprep.subr.mxu0 0.0
        %325 = vmatpush1.msra.mxu0 0.0
        %326 = vmatprep.subr.mxu0 0.0
        %327 = vmatpush1.msra.mxu0 0.0
        %328 = vmatprep.subr.mxu0 0.0
        %329 = vmatpush1.msra.mxu0 0.0
        %330 = vmatprep.subr.mxu0 0.0
        %331 = vmatpush1.msra.mxu0 %v261
        %332 = vmatprep.subr.mxu0 0.0
        %333 = vmatpush2.msra.mxu0 0.0
        %334 = vmatprep.subr.mxu0 0.0
        %335 = vmatpush2.msra.mxu0 0.0
        %336 = vmatprep.subr.mxu0 0.0
        %337 = vmatpush2.msra.mxu0 0.0
        %338 = vmatprep.subr.mxu0 0.0
        %339 = vmatpush2.msra.mxu0 0.0
        %340 = vmatprep.subr.mxu0 0.0
        %341 = vmatpush2.msra.mxu0 0.0
        %342 = vmatprep.subr.mxu0 0.0
        %343 = vmatpush2.msra.mxu0 0.0
        %344 = vmatprep.subr.mxu0 0.0
        %345 = vmatpush2.msra.mxu0 0.0
        %346 = vmatprep.subr.mxu0 0.0
        %347 = vmatpush2.msra.mxu0 0.0
        %348 = vmatprep.subr.mxu0 0.0
        %349 = vmatpush2.msra.mxu0 0.0
        %350 = vmatprep.subr.mxu0 0.0
        %351 = vmatpush2.msra.mxu0 0.0
        %352 = vmatprep.subr.mxu0 0.0
        %353 = vmatpush2.msra.mxu0 0.0
        %354 = vmatprep.subr.mxu0 0.0
        %355 = vmatpush2.msra.mxu0 0.0
        %356 = vmatprep.subr.mxu0 0.0
        %357 = vmatpush2.msra.mxu0 0.0
        %358 = vmatprep.subr.mxu0 0.0
        %359 = vmatpush2.msra.mxu0 0.0
        %360 = vmatprep.subr.mxu0 0.0
        %361 = vmatpush2.msra.mxu0 0.0
        %362 = vmatprep.subr.mxu0 0.0
        %363 = vmatpush2.msra.mxu0 0.0
        %364 = vmatprep.mubr.f32.mxu0 0.0
        %365 = vmatmul.mubr.f32.gmra.mxu0 %v298
        %v366 = vpop.f32.mrf.mxu0
        %v367 = vadd.f32 0.0, %v366
        %v368 = vpop.f32.mrf.mxu0
        %369 = vdwg.mxu0
        %v370 = vmul.f32 %v367, 0.0625
        %v371 = vadd.f32 %v263, %v370
        %vm372 = vcmask 27648
        %373 = vst.msk [vmem:[#allocation2] sm:$0xf] %vm372, %v371
        %v374 = vld [vmem:[#allocation3] sm:$0x1]
        %v375 = vsel %vm228, %v262, 0.0
        %376 = vadd.xlane.f32.xlu0 %v375
        %v377 = vpop.xlane.xlu0 %376
        %v378 = vmul.f32 %v258, %v377
        %vm379 = vcmask 7168
        %v380 = vsel %vm379, %v378, 0.0
        %381 = vadd.xlane.f32.xlu0 %v380
        %v382 = vpop.xlane.xlu0 %381
        %v383 = vrot.slane %v382, 4
        %v384 = vadd.f32 %v382, %v383
        %v385 = vrot.slane %v384, 2
        %v386 = vadd.f32 %v384, %v385
        %v387 = vrot.slane %v386, 1
        %v388 = vadd.f32 %v386, %v387
        %s389 = vtos %v388
        %s390 = smul.f32 %s389, 0.0625
        %v391 = vstv %s390
        %v392 = vadd.f32 %v374, %v391
        %vm393 = vcmask 0
        %394 = vst.msk [vmem:[#allocation3] sm:$0x1] %vm393, %v392
        %p395 = scmp.eq.s32.totalorder %s17, 1
        // Predicated region
        $region37: #{tpu_custom_call.1} parent=31 // pred_check
          %p396 = pneg %p395
        $region38: #{tpu_custom_call.1} parent=31 // pred_check_branch
          %398 = sbr.rel (%p396) target = $region40
        $region39: #{tpu_custom_call.1} parent=31 // pred_region
          %v399 = vld [vmem:[#allocation2] sm:$0xf]
          %v400 = vmul.f32 %v399, %v399
          %v401 = vsel %vm372, %v400, 0.0
          %402 = vadd.xlane.f32.xlu0 %v401
          %v403 = vpop.xlane.xlu0 %402
          %v404 = vrot.slane %v403, 4
          %v405 = vadd.f32 %v403, %v404
          %v406 = vrot.slane %v405, 2
          %v407 = vadd.f32 %v405, %v406
          %v408 = vrot.slane %v407, 1
          %v409 = vadd.f32 %v407, %v408
          %s410 = vtos %v409
          %v411 = vld [vmem:[#allocation3] sm:$0x1]
          %v412 = vadd.f32 %v411, 0.0
          %s413 = vtos %v412
          %s414 = smul.f32 %s410, 10.0
          %s415 = sadd.f32 %s413, %s414
          %vm416 = vcmp.eq.s32.totalorder %v244, 0
          %vm417 = vcmp.eq.s32.totalorder %v244, 1
          %vm418 = vcmp.eq.s32.totalorder %v244, 2
          %v419 = vstv %s410
          %v420 = vsel %vm418, %v419, 0.0
          %v421 = vstv %s413
          %v422 = vsel %vm417, %v421, %v420
          %v423 = vstv %s415
          %v424 = vsel %vm416, %v423, %v422
          %425 = vst [vmem:[#allocation6] sm:$0x1] %v424
        $region40: #{tpu_custom_call.1} parent=31 // pred_fallthru
          _
        // Predicated region
        $region41: #{tpu_custom_call.1} parent=31 // pred_check
          %p426 = pneg %p112
        $region42: #{tpu_custom_call.1} parent=31 // pred_check_branch
          %428 = sbr.rel (%p426) target = $region44
        $region43: #{tpu_custom_call.1} parent=31 // pred_region
          %s430 = ssub.s32 16, 16
          %431 = vsyncadd [#allocation7], %s430
          %s433 = sshll.u32 [#allocation6], 4
          %s434 = int_to_ptr.vmem [resolvable:$true] %s433
          %436 = dma.vmem_to_hbm [thread:$0]  %s434, 16, %s4, [#allocation7]
        $region44: #{tpu_custom_call.1} parent=31 // pred_fallthru
          _
        // Predicated region
        $region45: #{tpu_custom_call.1} parent=31 // pred_check
          %p437 = pneg %p112
        $region46: #{tpu_custom_call.1} parent=31 // pred_check_branch
          %439 = sbr.rel (%p437) target = $region48
        $region47: #{tpu_custom_call.1} parent=31 // pred_region
          %440 = dma.done [#allocation7], 16
        $region48: #{tpu_custom_call.1} parent=31 // pred_fallthru
          _
      $region32: #{tpu_custom_call.1} parent=5 // pred_fallthru
        _
      %p441 = scmp.le.s32.totalorder 2, %s12
      // Predicated region
      $region49: #{tpu_custom_call.1} parent=5 // pred_check
        %p442 = pneg %p441
      $region50: #{tpu_custom_call.1} parent=5 // pred_check_branch
        %444 = sbr.rel (%p442) target = $region52
      $region51: #{tpu_custom_call.1} parent=5 // pred_region
        %s445 = ssub.s32 %s12, 2
      $region52: #{tpu_custom_call.1} parent=5 // pred_fallthru
        _
    $region6: #{tpu_custom_call.1} parent=1 // loop_footer
      %s16 = sadd.s32 1, %s12
    $region7: #{tpu_custom_call.1} parent=1 // loop_footer_branch
      %11 = sbr.rel target = $region3
    $region8: #{tpu_custom_call.1} parent=1 // loop_exit
      _
    %446 = vsyncpa [#allocation7], 1
    %s447 = scalar_lea.sflag [#allocation7], 1
    %448 = vsyncpa %s447, 1

</llo_original>
